<compile_context>
chip_gen: v7x
topology: tpu7x:2x2x1
jax: 0.10.0
libtpu: 0.0.40
codegen_flags: <defaults>
</compile_context>

<pallas_src>
import jax
import jax.numpy as jnp
from jax.experimental import pallas as pl
from jax.experimental.pallas import tpu as pltpu


def _round_up(x, m):
    return (x + m - 1) // m * m


def _vmem_policy():
    """Return (per-block VMEM budget, scoped vmem_limit_bytes) for this chip."""
    try:
        cap = int(getattr(pltpu.get_tpu_info(), "vmem_capacity_bytes", 0))
    except Exception:
        cap = 0
    if cap <= 0:
        cap = 64 * 1024 * 1024                     # conservative (v7x-safe) default
    if cap >= 96 * 1024 * 1024:                    # v5e / v6e class: 128 MiB VMEM
        return 48 * 1024 * 1024, 96 * 1024 * 1024
    return 24 * 1024 * 1024, 48 * 1024 * 1024      # v7x class: 64 MiB per TC


def _band_matrix(n, r, dtype):
    """Banded 0/1 matrix: B[i, j] = 1 iff |i - j| <= r  (clamped box-sum op)."""
    idx = jnp.arange(n, dtype=jnp.int32)
    return (jnp.abs(idx[:, None] - idx[None, :]) <= r).astype(dtype)


# ---------------------------------------------------------------------------
# Path A: small planes — one matmul on a lane-dense (TB, H*W) block.
#   y_flat = x_flat @ kron(B_H, B_W)
# ---------------------------------------------------------------------------
def _boxfilter_kernel_kron(k_ref, x_ref, o_ref):
    # k_ref: (HW, HW) resident constant (whole array in VMEM, single-buffered).
    # x_ref / o_ref: (TB, HW) lane-dense blocks.
    o_ref[...] = jnp.dot(
        x_ref[...], k_ref[...], preferred_element_type=jnp.float32
    ).astype(o_ref.dtype)


# ---------------------------------------------------------------------------
# Path B: general planes — two batched band matmuls per block of TB planes.
#   y[b] = B_H @ (x[b] @ B_W)
# ---------------------------------------------------------------------------
def _boxfilter_kernel_2mm(bh_ref, bw_ref, x_ref, o_ref):
    # bh_ref (Hp, Hp) / bw_ref (Wp, Wp): resident constants (VMEM, 1-buffered).
    # x_ref / o_ref: (TB, Hp, Wp) with Hp % 8(/16) == 0 and Wp % 128 == 0.
    TB, Hp, Wp = x_ref.shape
    bw = bw_ref[...]                                   # input dtype (bf16 MXU ok)
    bh = bh_ref[...].astype(jnp.float32)               # second matmul runs in f32
    x = x_ref[...]

    # W direction: all TB planes batched on the matmul M dim (big MXU M-dim,
    # one push sequence instead of TB small ones).  Hp % sublane == 0 keeps the
    # leading-dim merge layout-free.
    xw = jnp.dot(x.reshape(TB * Hp, Wp), bw,
                 preferred_element_type=jnp.float32)    # (TB*Hp, Wp) f32

    # H direction, batched: lane-transpose each plane (XLU, separate slot from
    # the MXU) so H becomes the contraction dim of one big matmul.  Band
    # matrices are symmetric, so right-multiplying by B_H == left-multiplying.
    # Intermediate stays f32; only the final store casts to the output dtype.
    xwt = jnp.swapaxes(xw.reshape(TB, Hp, Wp), 1, 2)    # (TB, Wp, Hp) f32
    yt = jnp.dot(xwt.reshape(TB * Wp, Hp), bh,
                 preferred_element_type=jnp.float32)    # (TB*Wp, Hp) f32
    y = jnp.swapaxes(yt.reshape(TB, Wp, Hp), 1, 2)      # (TB, Hp, Wp) f32
    o_ref[...] = y.astype(o_ref.dtype)


# ---------------------------------------------------------------------------
# Wrapper
# ---------------------------------------------------------------------------
def box_filter(x, r):
    """x: (B, C, H, W) float array. Returns clamped box-filter sums, same shape."""
    B, C, H, W = x.shape
    assert H > 2 * r + 1 and W > 2 * r + 1, "spatial dims must exceed 2r+1"
    N = B * C
    dtype = x.dtype
    esize = jnp.dtype(dtype).itemsize
    pack = 16 if esize < 4 else 8            # bf16 packs 16 rows per vreg

    vmem_budget, vmem_limit = _vmem_policy()
    cparams = pltpu.CompilerParams(
        dimension_semantics=("parallel",),
        vmem_limit_bytes=vmem_limit,
    )

    # Fused-kron threshold (Path A stays HBM-bound roughly up to this HW);
    # conservative per-generation values, doubled for bf16.
    kron_max_hw = 1024 if vmem_budget >= 48 * 1024 * 1024 else 1280
    if esize < 4:
        kron_max_hw *= 2

    HW = H * W
    kron_bytes = HW * HW * esize
    # Prefer Path A while HBM-bound, and whenever W < 128 (Path B would need a
    # big W pad), provided the kron constant leaves room for data blocks.
    use_path_a = (HW <= kron_max_hw or W < 128) and kron_bytes <= vmem_budget // 2

    # ----------------- Path A: fused single matmul, lane-dense ----------------
    if use_path_a:
        Np = _round_up(N, pack)                         # pad N for clean sublanes
        per_row = 4 * HW * esize + 4 * HW               # in/out dbl-buffered + f32 acc
        tb_cap = max(pack, (vmem_budget - kron_bytes) // per_row)
        # Keep >= 2 (prefer 4) grid steps: pipelining + v7x two-TC sharding.
        if Np >= 4 * pack:
            tb_cap = min(tb_cap, Np // 4)
        elif Np >= 2 * pack:
            tb_cap = min(tb_cap, Np // 2)
        start = max(pack, min(tb_cap, Np) // pack * pack)
        tb = pack
        for d in range(start, pack - 1, -pack):         # largest mult-of-pack divisor
            if Np % d == 0:
                tb = d
                break

        x_flat = x.reshape(N, HW)                       # contiguous -> free reshape
        if Np != N:
            x_flat = jnp.pad(x_flat, ((0, Np - N), (0, 0)))
        kmat = jnp.kron(_band_matrix(H, r, dtype), _band_matrix(W, r, dtype))

        out = pl.pallas_call(
            _boxfilter_kernel_kron,
            out_shape=jax.ShapeDtypeStruct((Np, HW), dtype),
            grid_spec=pltpu.PrefetchScalarGridSpec(
                num_scalar_prefetch=0,
                grid=(Np // tb,),
                in_specs=[
                    # Resident constant: whole array in VMEM, single-buffered.
                    pl.BlockSpec(memory_space=pltpu.MemorySpace.VMEM),
                    pl.BlockSpec((tb, HW), lambda i: (i, 0)),
                ],
                out_specs=pl.BlockSpec((tb, HW), lambda i: (i, 0)),
            ),
            compiler_params=cparams,
            cost_estimate=pl.CostEstimate(
                flops=2 * Np * HW * HW,
                transcendentals=0,
                bytes_accessed=(2 * Np * HW + HW * HW) * esize,
            ),
        )(kmat, x_flat)
        return out[:N].reshape(B, C, H, W)

    # ----------------- Path B: two batched band matmuls per block -------------
    # Zero-pad H -> sublane multiple, W -> multiple of 128 (exact: padded input
    # is zero and the band just sums it) for unmasked lane-dense loads/stores.
    # TODO(synk): for very large planes with small r the dense band matmul goes
    # MXU-bound (first on v5e); a block-banded / prefix-sum path is not
    # implemented here.
    Hp = _round_up(H, pack)
    Wp = _round_up(W, 128)
    x3 = x.reshape(N, H, W)
    if (Hp, Wp) != (H, W):
        x3 = jnp.pad(x3, ((0, 0), (0, Hp - H), (0, Wp - W)))
    bh = _band_matrix(Hp, r, dtype)
    bw = _band_matrix(Wp, r, dtype)

    const_bytes = (Hp * Hp + Wp * Wp) * esize           # single-buffered constants
    plane_bytes = Hp * Wp * (4 * esize + 12)            # in/out dbl-buf + f32 temps
    tb_cap = max(1, (vmem_budget - const_bytes) // plane_bytes)
    if N >= 16:
        tb_cap = min(tb_cap, max(1, N // 4))
    elif N > 1:
        tb_cap = min(tb_cap, max(1, N // 2))
    tb = 1
    for d in range(min(N, tb_cap), 0, -1):              # largest divisor <= cap
        if N % d == 0:
            tb = d
            break

    out = pl.pallas_call(
        _boxfilter_kernel_2mm,
        out_shape=jax.ShapeDtypeStruct((N, Hp, Wp), dtype),
        grid_spec=pltpu.PrefetchScalarGridSpec(
            num_scalar_prefetch=0,
            grid=(N // tb,),
            in_specs=[
                pl.BlockSpec(memory_space=pltpu.MemorySpace.VMEM),   # B_H resident
                pl.BlockSpec(memory_space=pltpu.MemorySpace.VMEM),   # B_W resident
                pl.BlockSpec((tb, Hp, Wp), lambda i: (i, 0, 0)),
            ],
            out_specs=pl.BlockSpec((tb, Hp, Wp), lambda i: (i, 0, 0)),
        ),
        compiler_params=cparams,
        cost_estimate=pl.CostEstimate(
            flops=2 * N * Hp * Wp * (Hp + Wp),
            transcendentals=0,
            bytes_accessed=(2 * N * Hp * Wp + Hp * Hp + Wp * Wp) * esize,
        ),
    )(bh, bw, x3)
    return out[:, :H, :W].reshape(B, C, H, W)


# ---------------------------------------------------------------------------
# Pure-JAX reference mirroring the PyTorch code.
# ---------------------------------------------------------------------------
def _box_filter_ref(x, r):
    def diff_x(inp, rr):
        Hd = inp.shape[2]
        left = inp[:, :, rr:2 * rr + 1]
        middle = inp[:, :, 2 * rr + 1:] - inp[:, :, :Hd - 2 * rr - 1]
        right = inp[:, :, Hd - 1:Hd] - inp[:, :, Hd - 2 * rr - 1:Hd - rr - 1]
        return jnp.concatenate([left, middle, right], axis=2)

    def diff_y(inp, rr):
        Wd = inp.shape[3]
        left = inp[:, :, :, rr:2 * rr + 1]
        middle = inp[:, :, :, 2 * rr + 1:] - inp[:, :, :, :Wd - 2 * rr - 1]
        right = inp[:, :, :, Wd - 1:Wd] - inp[:, :, :, Wd - 2 * rr - 1:Wd - rr - 1]
        return jnp.concatenate([left, middle, right], axis=3)

    return diff_y(diff_x(jnp.cumsum(x, axis=2), r).cumsum(axis=3), r)


if __name__ == "__main__":
    keys = jax.random.split(jax.random.PRNGKey(0), 6)

    def _check(x, r, atol, rtol):
        y = box_filter(x, r)
        jax.block_until_ready(y)
        y_ref = _box_filter_ref(x.astype(jnp.float32), r)
        assert y.shape == x.shape, (y.shape, x.shape)
        assert jnp.allclose(y.astype(jnp.float32), y_ref, atol=atol, rtol=rtol), (
            x.shape, str(x.dtype))

    # Path A: small plane, fused kron matmul, lane-dense (HW = 256).
    _check(jax.random.normal(keys[0], (2, 4, 16, 16), jnp.float32), 3, 1e-4, 1e-4)
    # Path A via the W < 128 preference (HW = 640); N zero-padded 4 -> 8.
    _check(jax.random.normal(keys[1], (2, 2, 16, 40), jnp.float32), 3, 1e-4, 1e-4)
    # Path B: aligned plane (16 x 256), batched band matmuls, multi-step grid.
    _check(jax.random.normal(keys[2], (2, 2, 16, 256), jnp.float32), 3, 1e-3, 1e-4)
    # Path B with H/W padding (10 x 200 -> 16 x 256), output sliced back.
    _check(jax.random.normal(keys[3], (1, 3, 10, 200), jnp.float32), 2, 1e-3, 1e-4)
    # bf16: Path A (pack = 16) and Path B (H padded 18 -> 32, f32 intermediate).
    _check(jax.random.normal(keys[4], (2, 8, 16, 16)).astype(jnp.bfloat16), 3, 0.25, 5e-2)
    _check(jax.random.normal(keys[5], (2, 2, 18, 256)).astype(jnp.bfloat16), 3, 0.3, 5e-2)

    print("KERNEL_OK")
</pallas_src>

<mosaic_0001>
module attributes {stable_mosaic.version = 11 : i64} {
  func.func @_boxfilter_kernel_kron(%arg0: i32, %arg1: memref<256x256xf32, #tpu.memory_space<vmem>>, %arg2: memref<8x256xf32, #tpu.memory_space<vmem>>, %arg3: memref<8x256xf32, #tpu.memory_space<vmem>>) attributes {dimension_semantics = [#tpu.dimension_semantics<parallel>], iteration_bounds = array<i64: 1>, scalar_prefetch = 0 : i64, scratch_operands = 0 : i64, tpu.core_type = #tpu.core_type<tc>, window_params = [{pipeline_mode = #tpu.pipeline_mode<synchronous>, transform_indices = @transform_0, window_bounds = array<i64: 256, 256>}, {transform_indices = @transform_1, window_bounds = array<i64: 8, 256>}, {transform_indices = @transform_2, window_bounds = array<i64: 8, 256>}]} {
    %c0 = arith.constant 0 : index
    %c0_0 = arith.constant 0 : index
    %0 = vector.load %arg2[%c0, %c0_0] : memref<8x256xf32, #tpu.memory_space<vmem>>, vector<8x256xf32>
    %c0_1 = arith.constant 0 : index
    %c0_2 = arith.constant 0 : index
    %1 = vector.load %arg1[%c0_1, %c0_2] : memref<256x256xf32, #tpu.memory_space<vmem>>, vector<256x256xf32>
    %cst = arith.constant dense<0.000000e+00> : vector<8x256xf32>
    %2 = tpu.matmul %0, %1, %cst {dimension_numbers = #tpu.dot_dimension_numbers<[1], [0], [0], [1], [0, 0, 1, 1], [], []>} : vector<8x256xf32>, vector<256x256xf32>, vector<8x256xf32> -> vector<8x256xf32>
    %c0_3 = arith.constant 0 : index
    %c0_4 = arith.constant 0 : index
    %3 = vector.load %arg3[%c0_3, %c0_4] : memref<8x256xf32, #tpu.memory_space<vmem>>, vector<8x256xf32>
    tpu.vector_store %arg3[%c0_3, %c0_4], %2 {strides = array<i32>} : memref<8x256xf32, #tpu.memory_space<vmem>>, vector<8x256xf32>,
    return
  }
  func.func @transform_0(%arg0: i32) -> (i32, i32) {
    %c0_i32 = arith.constant 0 : i32
    %c0_i32_0 = arith.constant 0 : i32
    %c0_i32_1 = arith.constant 0 : i32
    return %c0_i32, %c0_i32_0 : i32, i32
  }
  func.func @transform_1(%arg0: i32) -> (i32, i32) {
    %c0_i32 = arith.constant 0 : i32
    %c0_i32_0 = arith.constant 0 : i32
    return %arg0, %c0_i32 : i32, i32
  }
  func.func @transform_2(%arg0: i32) -> (i32, i32) {
    %c0_i32 = arith.constant 0 : i32
    %c0_i32_0 = arith.constant 0 : i32
    return %arg0, %c0_i32 : i32, i32
  }
}

</mosaic_0001>

<llo_original>
// kernel: tpu_custom_call.1
$region0: #{tpu_custom_call.1}
  #allocation0 [shape = 'u32[]', space=smem, size = 0x4, offset = 0x4, fixed_abs, tag = 'smem constant byte address 0x4 - core index']
  #allocation1 [shape = 'u32[144,128]{1,0:T(1,128)}', space=vmem, size = 0x12000, scoped, tag = 'internal scratch']
  %s0 = inlined_call_operand.hbm [shape: f32[256,256], index: 0, kind: input, shape index: {}]
  %s1 = inlined_call_operand.hbm [shape: f32[8,256], index: 1, kind: input, shape index: {}]
  %s2 = inlined_call_operand.hbm [shape: f32[8,256], index: 2, kind: output, shape index: {}]
  %s3 = sld [smem:[#allocation0]]
  $region26: #{tpu_custom_call.1} parent=0
    _
  %s5 = ssub.s32 1, %s3
  %s6 = scalar_select 0, %s5, %s3
  $region1: #{tpu_custom_call.1} parent=0
    #allocation2 [shape = 'u8[262144]{0}', space=vmem, size = 0x40000, scoped, tag = 'input window, operand 0, single buffered']
    #allocation3 [shape = 's32[1]{0}', space=sflag, size = 0x4, scoped, tag = 'scoped memory for tpu_custom_call.1']
    #allocation4 [shape = 's32[1]{0}', space=sflag, size = 0x4, scoped, tag = 'scoped memory for tpu_custom_call.1']
    #allocation5 [shape = 'u8[8192]{0}', space=vmem, size = 0x2000, scoped, tag = 'input window, operand 1, single buffered']
    #allocation6 [shape = 's32[1]{0}', space=sflag, size = 0x4, scoped, tag = 'scoped memory for tpu_custom_call.1']
    #allocation7 [shape = 'u8[8192]{0}', space=vmem, size = 0x2000, scoped, tag = 'output window, operand 0, single buffered']
    %7 = vsyncpa [#allocation3], 0
    %8 = vsyncpa [#allocation6], 0
    %9 = vsyncpa [#allocation4], 0
    // Predicated region
    $region2: #{tpu_custom_call.1} parent=1 // pred_check
      _
    $region3: #{tpu_custom_call.1} parent=1 // pred_check_branch
      %11 = sbr.rel (0) target = $region5
    $region4: #{tpu_custom_call.1} parent=1 // pred_region
      %s13 = ssub.s32 8192, 8192
      %14 = vsyncadd [#allocation3], %s13
      %s15 = sshll.u32 [#allocation2], 4
      %s16 = int_to_ptr.vmem [resolvable:$true] %s15
      %21 = dma.hbm_to_vmem [thread:$0]  %s0, 8192, %s16, [#allocation3], 256, 256, 16
    $region5: #{tpu_custom_call.1} parent=1 // pred_fallthru
      _
    // Predicated region
    $region6: #{tpu_custom_call.1} parent=1 // pred_check
      _
    $region7: #{tpu_custom_call.1} parent=1 // pred_check_branch
      %23 = sbr.rel (0) target = $region9
    $region8: #{tpu_custom_call.1} parent=1 // pred_region
      %s25 = ssub.s32 256, 256
      %26 = vsyncadd [#allocation6], %s25
      %s28 = sshll.u32 [#allocation5], 4
      %s29 = int_to_ptr.vmem [resolvable:$true] %s28
      %31 = dma.hbm_to_vmem [thread:$0]  %s1, 256, %s29, [#allocation6]
    $region9: #{tpu_custom_call.1} parent=1 // pred_fallthru
      _
    // Predicated region
    $region10: #{tpu_custom_call.1} parent=1 // pred_check
      _
    $region11: #{tpu_custom_call.1} parent=1 // pred_check_branch
      %33 = sbr.rel (0) target = $region13
    $region12: #{tpu_custom_call.1} parent=1 // pred_region
      %34 = dma.done [#allocation3], 8192
    $region13: #{tpu_custom_call.1} parent=1 // pred_fallthru
      _
    // Predicated region
    $region14: #{tpu_custom_call.1} parent=1 // pred_check
      _
    $region15: #{tpu_custom_call.1} parent=1 // pred_check_branch
      %36 = sbr.rel (0) target = $region17
    $region16: #{tpu_custom_call.1} parent=1 // pred_region
      %37 = dma.done [#allocation6], 256
    $region17: #{tpu_custom_call.1} parent=1 // pred_fallthru
      _
    %v38 = vld [vmem:[#allocation5] sm:$0xff]
    %v39 = vld [vmem:[#allocation5 + $0x8] sm:$0xff]
    %v40 = vld [vmem:[#allocation2] sm:$0xff]
    %v41 = vld [vmem:[#allocation2 + $0x8] sm:$0xff]
    %v42 = vld [vmem:[#allocation2 + $0x10] sm:$0xff]
    %v43 = vld [vmem:[#allocation2 + $0x18] sm:$0xff]
    %v44 = vld [vmem:[#allocation2 + $0x20] sm:$0xff]
    %v45 = vld [vmem:[#allocation2 + $0x28] sm:$0xff]
    %v46 = vld [vmem:[#allocation2 + $0x30] sm:$0xff]
    %v47 = vld [vmem:[#allocation2 + $0x38] sm:$0xff]
    %v48 = vld [vmem:[#allocation2 + $0x40] sm:$0xff]
    %v49 = vld [vmem:[#allocation2 + $0x48] sm:$0xff]
    %v50 = vld [vmem:[#allocation2 + $0x50] sm:$0xff]
    %v51 = vld [vmem:[#allocation2 + $0x58] sm:$0xff]
    %v52 = vld [vmem:[#allocation2 + $0x60] sm:$0xff]
    %v53 = vld [vmem:[#allocation2 + $0x68] sm:$0xff]
    %v54 = vld [vmem:[#allocation2 + $0x70] sm:$0xff]
    %v55 = vld [vmem:[#allocation2 + $0x78] sm:$0xff]
    %v56 = vld [vmem:[#allocation2 + $0x80] sm:$0xff]
    %v57 = vld [vmem:[#allocation2 + $0x88] sm:$0xff]
    %v58 = vld [vmem:[#allocation2 + $0x90] sm:$0xff]
    %v59 = vld [vmem:[#allocation2 + $0x98] sm:$0xff]
    %v60 = vld [vmem:[#allocation2 + $0xa0] sm:$0xff]
    %v61 = vld [vmem:[#allocation2 + $0xa8] sm:$0xff]
    %v62 = vld [vmem:[#allocation2 + $0xb0] sm:$0xff]
    %v63 = vld [vmem:[#allocation2 + $0xb8] sm:$0xff]
    %v64 = vld [vmem:[#allocation2 + $0xc0] sm:$0xff]
    %v65 = vld [vmem:[#allocation2 + $0xc8] sm:$0xff]
    %v66 = vld [vmem:[#allocation2 + $0xd0] sm:$0xff]
    %v67 = vld [vmem:[#allocation2 + $0xd8] sm:$0xff]
    %v68 = vld [vmem:[#allocation2 + $0xe0] sm:$0xff]
    %v69 = vld [vmem:[#allocation2 + $0xe8] sm:$0xff]
    %v70 = vld [vmem:[#allocation2 + $0xf0] sm:$0xff]
    %v71 = vld [vmem:[#allocation2 + $0xf8] sm:$0xff]
    %v72 = vld [vmem:[#allocation2 + $0x100] sm:$0xff]
    %v73 = vld [vmem:[#allocation2 + $0x108] sm:$0xff]
    %v74 = vld [vmem:[#allocation2 + $0x110] sm:$0xff]
    %v75 = vld [vmem:[#allocation2 + $0x118] sm:$0xff]
    %v76 = vld [vmem:[#allocation2 + $0x120] sm:$0xff]
    %v77 = vld [vmem:[#allocation2 + $0x128] sm:$0xff]
    %v78 = vld [vmem:[#allocation2 + $0x130] sm:$0xff]
    %v79 = vld [vmem:[#allocation2 + $0x138] sm:$0xff]
    %v80 = vld [vmem:[#allocation2 + $0x140] sm:$0xff]
    %v81 = vld [vmem:[#allocation2 + $0x148] sm:$0xff]
    %v82 = vld [vmem:[#allocation2 + $0x150] sm:$0xff]
    %v83 = vld [vmem:[#allocation2 + $0x158] sm:$0xff]
    %v84 = vld [vmem:[#allocation2 + $0x160] sm:$0xff]
    %v85 = vld [vmem:[#allocation2 + $0x168] sm:$0xff]
    %v86 = vld [vmem:[#allocation2 + $0x170] sm:$0xff]
    %v87 = vld [vmem:[#allocation2 + $0x178] sm:$0xff]
    %v88 = vld [vmem:[#allocation2 + $0x180] sm:$0xff]
    %v89 = vld [vmem:[#allocation2 + $0x188] sm:$0xff]
    %v90 = vld [vmem:[#allocation2 + $0x190] sm:$0xff]
    %v91 = vld [vmem:[#allocation2 + $0x198] sm:$0xff]
    %v92 = vld [vmem:[#allocation2 + $0x1a0] sm:$0xff]
    %v93 = vld [vmem:[#allocation2 + $0x1a8] sm:$0xff]
    %v94 = vld [vmem:[#allocation2 + $0x1b0] sm:$0xff]
    %v95 = vld [vmem:[#allocation2 + $0x1b8] sm:$0xff]
    %v96 = vld [vmem:[#allocation2 + $0x1c0] sm:$0xff]
    %v97 = vld [vmem:[#allocation2 + $0x1c8] sm:$0xff]
    %v98 = vld [vmem:[#allocation2 + $0x1d0] sm:$0xff]
    %v99 = vld [vmem:[#allocation2 + $0x1d8] sm:$0xff]
    %v100 = vld [vmem:[#allocation2 + $0x1e0] sm:$0xff]
    %v101 = vld [vmem:[#allocation2 + $0x1e8] sm:$0xff]
    %v102 = vld [vmem:[#allocation2 + $0x1f0] sm:$0xff]
    %v103 = vld [vmem:[#allocation2 + $0x1f8] sm:$0xff]
    %104 = vmatprep.subr.mxu0 %v41
    %105 = vmatpush1.msra.mxu0 %v40
    %106 = vmatprep.subr.mxu0 %v43
    %107 = vmatpush1.msra.mxu0 %v42
    %108 = vmatprep.subr.mxu0 %v45
    %109 = vmatpush1.msra.mxu0 %v44
    %110 = vmatprep.subr.mxu0 %v47
    %111 = vmatpush1.msra.mxu0 %v46
    %112 = vmatprep.subr.mxu0 %v49
    %113 = vmatpush1.msra.mxu0 %v48
    %114 = vmatprep.subr.mxu0 %v51
    %115 = vmatpush1.msra.mxu0 %v50
    %116 = vmatprep.subr.mxu0 %v53
    %117 = vmatpush1.msra.mxu0 %v52
    %118 = vmatprep.subr.mxu0 %v55
    %119 = vmatpush1.msra.mxu0 %v54
    %120 = vmatprep.subr.mxu0 %v57
    %121 = vmatpush1.msra.mxu0 %v56
    %122 = vmatprep.subr.mxu0 %v59
    %123 = vmatpush1.msra.mxu0 %v58
    %124 = vmatprep.subr.mxu0 %v61
    %125 = vmatpush1.msra.mxu0 %v60
    %126 = vmatprep.subr.mxu0 %v63
    %127 = vmatpush1.msra.mxu0 %v62
    %128 = vmatprep.subr.mxu0 %v65
    %129 = vmatpush1.msra.mxu0 %v64
    %130 = vmatprep.subr.mxu0 %v67
    %131 = vmatpush1.msra.mxu0 %v66
    %132 = vmatprep.subr.mxu0 %v69
    %133 = vmatpush1.msra.mxu0 %v68
    %134 = vmatprep.subr.mxu0 %v71
    %135 = vmatpush1.msra.mxu0 %v70
    %136 = vmatprep.subr.mxu0 %v73
    %137 = vmatpush1.msra.mxu0 %v72
    %138 = vmatprep.subr.mxu0 %v75
    %139 = vmatpush1.msra.mxu0 %v74
    %140 = vmatprep.subr.mxu0 %v77
    %141 = vmatpush1.msra.mxu0 %v76
    %142 = vmatprep.subr.mxu0 %v79
    %143 = vmatpush1.msra.mxu0 %v78
    %144 = vmatprep.subr.mxu0 %v81
    %145 = vmatpush1.msra.mxu0 %v80
    %146 = vmatprep.subr.mxu0 %v83
    %147 = vmatpush1.msra.mxu0 %v82
    %148 = vmatprep.subr.mxu0 %v85
    %149 = vmatpush1.msra.mxu0 %v84
    %150 = vmatprep.subr.mxu0 %v87
    %151 = vmatpush1.msra.mxu0 %v86
    %152 = vmatprep.subr.mxu0 %v89
    %153 = vmatpush1.msra.mxu0 %v88
    %154 = vmatprep.subr.mxu0 %v91
    %155 = vmatpush1.msra.mxu0 %v90
    %156 = vmatprep.subr.mxu0 %v93
    %157 = vmatpush1.msra.mxu0 %v92
    %158 = vmatprep.subr.mxu0 %v95
    %159 = vmatpush1.msra.mxu0 %v94
    %160 = vmatprep.subr.mxu0 %v97
    %161 = vmatpush1.msra.mxu0 %v96
    %162 = vmatprep.subr.mxu0 %v99
    %163 = vmatpush1.msra.mxu0 %v98
    %164 = vmatprep.subr.mxu0 %v101
    %165 = vmatpush1.msra.mxu0 %v100
    %166 = vmatprep.subr.mxu0 %v103
    %167 = vmatpush1.msra.mxu0 %v102
    %168 = vmatprep.mubr.f32.mxu0 %v39
    %169 = vmatmul.mubr.f32.gmra.mrb[0].mxu0 %v38
    %v170 = vpop.f32.mrb[0].mxu0
    %v171 = vadd.f32 0.0, %v170
    %v172 = vpop.f32.mrb[0].mxu0
    %v173 = vadd.f32 0.0, %v172
    %174 = vdwg.mxu0
    %175 = vst [vmem:[#allocation7] sm:$0xff] %v171
    %176 = vst [vmem:[#allocation7 + $0x8] sm:$0xff] %v173
    // Predicated region
    $region18: #{tpu_custom_call.1} parent=1 // pred_check
      _
    $region19: #{tpu_custom_call.1} parent=1 // pred_check_branch
      %178 = sbr.rel (0) target = $region21
    $region20: #{tpu_custom_call.1} parent=1 // pred_region
      %s180 = ssub.s32 256, 256
      %181 = vsyncadd [#allocation4], %s180
      %s183 = sshll.u32 [#allocation7], 4
      %s184 = int_to_ptr.vmem [resolvable:$true] %s183
      %186 = dma.vmem_to_hbm [thread:$0]  %s184, 256, %s2, [#allocation4]
    $region21: #{tpu_custom_call.1} parent=1 // pred_fallthru
      _
    // Predicated region
    $region22: #{tpu_custom_call.1} parent=1 // pred_check
      _
    $region23: #{tpu_custom_call.1} parent=1 // pred_check_branch
      %188 = sbr.rel (0) target = $region25
    $region24: #{tpu_custom_call.1} parent=1 // pred_region
      %189 = dma.done [#allocation4], 256
    $region25: #{tpu_custom_call.1} parent=1 // pred_fallthru
      _
    %190 = vsyncpa [#allocation3], 1
    %191 = vsyncpa [#allocation6], 1
    %192 = vsyncpa [#allocation4], 1

</llo_original>
